<compile_context>
chip_gen: v7x
topology: tpu7x:2x2x1
jax: 0.10.0
libtpu: 0.0.40
codegen_flags: <defaults>
</compile_context>

<pallas_src>
import functools

import jax
import jax.numpy as jnp
from jax.experimental import pallas as pl
from jax.experimental.pallas import tpu as pltpu


def _layernorm_kernel(x_ref, alpha_ref, bias_ref, o_ref, *, eps, d_model):
    # x_ref / o_ref: (row_block, d_model) VMEM tiles. Compute in f32.
    x = x_ref[...].astype(jnp.float32)

    # Two-pass mean / unbiased variance over the VMEM-resident tile.  The
    # kernel is HBM-bound, so the extra subtract/square + second lane reduce
    # ride in otherwise-idle VALU/XLU slots; numerically this avoids the
    # cancellation risk of the single-pass (ss - s*mean) form.
    mean = jnp.sum(x, axis=-1, keepdims=True) * jnp.float32(1.0 / d_model)
    diff = x - mean
    var = jnp.sum(diff * diff, axis=-1, keepdims=True) * jnp.float32(
        1.0 / (d_model - 1))  # torch.std default is ddof=1
    std = jnp.sqrt(var)

    # Exact reciprocal (approx=True would cost ~1e-3 rel. error and break the
    # 1e-5 match vs. the PyTorch reference); fold alpha into the per-row scale
    # so only one full-tile multiply + one add remain on the VALU path.
    inv = pl.reciprocal(std + jnp.float32(eps), approx=False)
    scale = alpha_ref[0] * inv                  # (row_block, 1)
    o_ref[...] = (diff * scale + bias_ref[0]).astype(o_ref.dtype)


def _vmem_capacity_bytes():
    """Physical VMEM of the attached TPU; conservative 64 MiB (v7x) fallback."""
    try:
        return int(pltpu.get_tpu_info().vmem_capacity_bytes)
    except Exception:
        return 64 * 1024 * 1024


def _pick_row_block(rows, d_model, itemsize, vmem_capacity_bytes):
    """Largest row tile that fits the VMEM budget, sized for this generation.

    Budget ~65% of physical VMEM: ~83 MiB on v5e/v6e (128 MiB), ~41 MiB on
    v7x (64 MiB).  Per-row footprint counts (in + out) double-buffers in the
    I/O dtype plus ~3 full-tile f32 compute temporaries.
    """
    budget = int(vmem_capacity_bytes * 0.65)
    bytes_per_row = 4 * d_model * itemsize + 3 * d_model * 4
    max_rows = max(8, budget // bytes_per_row)

    # Per-step byte target: ~4 MiB of input per grid step amortizes the
    # ~0.35 us fixed per-step overhead even for small d_model / fast HBM.
    target_rows = max(1024, (4 * 1024 * 1024) // (d_model * itemsize))

    rb = max(8, min(target_rows, int(max_rows)))
    rb = (rb // 8) * 8                       # sublane multiple of 8

    # Keep the grid at >= ~4 steps so v7x's two TensorCores each stream >= 2
    # tiles (harmless on single-TC v5e/v6e); skip for tiny inputs.
    if rows >= 32:
        rb = min(rb, max(8, (rows // 4) // 8 * 8))

    # No point exceeding the data (last block may be partial anyway).
    rows_up8 = ((rows + 7) // 8) * 8
    return max(8, min(rb, rows_up8))


def encoder_forward(x, mask, alpha, bias, *, eps=1e-6, row_block=None):
    """Encoder forward: (identity layer stack) -> LayerNormalization kernel.

    x:     (batch, seq, d_model), any float dtype (compute is f32 inside)
    mask:  unused (the Encoder's nn.ModuleList is empty -> layer loop is identity)
    alpha: (1,) float32 scale
    bias:  (1,) float32 shift
    """
    # TODO(synk): the nn.ModuleList `layers` has no concrete definition in the
    # reference module; with an empty list the loop is identity, so only the
    # final LayerNormalization is computed (mask is therefore unused).
    del mask

    B, S, D = x.shape
    rows = B * S
    x_flat = x.reshape(rows, D)
    itemsize = jnp.dtype(x.dtype).itemsize

    vmem_capacity = _vmem_capacity_bytes()
    if row_block is None:
        row_block = _pick_row_block(rows, D, itemsize, vmem_capacity)

    # No padding: rows are independent, so garbage lanes read in the partial
    # last block cannot contaminate valid rows, and their writes are masked.
    grid = pl.cdiv(rows, row_block)

    # Explicit scoped-VMEM budget: (in + out) x double-buffer in the I/O dtype,
    # plus f32 compute temporaries, plus headroom; clamped under physical VMEM.
    tile_bytes = row_block * D * itemsize
    need = 4 * tile_bytes + 3 * row_block * D * 4 + 4 * 1024 * 1024
    vmem_limit = int(min(int(vmem_capacity * 0.8),
                         max(need, 32 * 1024 * 1024)))

    # TODO(synk): if production d_model < 128, the output is lane-sparse
    # (masked partial stores); a lane-dense repack (folding rows into lanes
    # with a segmented reduce) would help but is skipped here since real
    # transformer d_model is >= 128.
    kernel = functools.partial(_layernorm_kernel, eps=eps, d_model=D)

    out_flat = pl.pallas_call(
        kernel,
        out_shape=jax.ShapeDtypeStruct((rows, D), x.dtype),
        grid_spec=pltpu.PrefetchScalarGridSpec(
            num_scalar_prefetch=0,
            grid=(grid,),
            in_specs=[
                pl.BlockSpec((row_block, D), lambda i: (i, 0)),
                pl.BlockSpec(memory_space=pltpu.MemorySpace.SMEM),
                pl.BlockSpec(memory_space=pltpu.MemorySpace.SMEM),
            ],
            out_specs=pl.BlockSpec((row_block, D), lambda i: (i, 0)),
        ),
        compiler_params=pltpu.CompilerParams(
            dimension_semantics=("parallel",),   # lets v7x shard across 2 TCs
            vmem_limit_bytes=vmem_limit,
        ),
    )(x_flat, alpha, bias)

    return out_flat.reshape(B, S, D)


def _reference(x, alpha, bias, eps=1e-6):
    xf = x.astype(jnp.float32)
    mean = jnp.mean(xf, axis=-1, keepdims=True)
    var = jnp.sum((xf - mean) ** 2, axis=-1, keepdims=True) / (x.shape[-1] - 1)
    std = jnp.sqrt(var)
    return (alpha[0] * (xf - mean) / (std + eps) + bias[0]).astype(x.dtype)


if __name__ == "__main__":
    key = jax.random.PRNGKey(0)
    B, S, D = 2, 8, 32  # batch=2, seq=8, d_model=32

    kx, _ = jax.random.split(key)
    x = jax.random.normal(kx, (B, S, D), dtype=jnp.float32)
    mask = jnp.ones((B, 1, S, S), dtype=jnp.float32)  # unused (no sub-layers)

    # Deterministic parameter init matching the PyTorch __init__.
    alpha = jnp.ones((1,), dtype=jnp.float32)
    bias = jnp.zeros((1,), dtype=jnp.float32)

    out = encoder_forward(x, mask, alpha, bias)
    out = jax.block_until_ready(out)

    ref = _reference(x, alpha, bias)
    assert out.shape == (B, S, D)
    assert jnp.allclose(out, ref, atol=1e-5, rtol=1e-5), "mismatch vs reference"

    print("KERNEL_OK")
</pallas_src>

<mosaic_0001>
module attributes {stable_mosaic.version = 11 : i64} {
  func.func @_layernorm_kernel(%arg0: i32, %arg1: memref<16x32xf32, #tpu.memory_space<vmem>>, %arg2: memref<1xf32, #tpu.memory_space<smem>>, %arg3: memref<1xf32, #tpu.memory_space<smem>>, %arg4: memref<16x32xf32, #tpu.memory_space<vmem>>) attributes {dimension_semantics = [#tpu.dimension_semantics<parallel>], iteration_bounds = array<i64: 1>, scalar_prefetch = 0 : i64, scratch_operands = 0 : i64, tpu.core_type = #tpu.core_type<tc>, window_params = [{transform_indices = @transform_0, window_bounds = array<i64: 16, 32>}, {transform_indices = @transform_1, window_bounds = array<i64: 1>}, {transform_indices = @transform_2, window_bounds = array<i64: 1>}, {transform_indices = @transform_3, window_bounds = array<i64: 16, 32>}]} {
    %c0 = arith.constant 0 : index
    %c0_0 = arith.constant 0 : index
    %0 = vector.load %arg1[%c0, %c0_0] : memref<16x32xf32, #tpu.memory_space<vmem>>, vector<16x32xf32>
    %cst = arith.constant dense<0.000000e+00> : vector<16xf32>
    %1 = vector.multi_reduction <add>, %0, %cst [1] : vector<16x32xf32> to vector<16xf32>
    %2 = vector.shape_cast %1 : vector<16xf32> to vector<16x1xf32>
    %cst_1 = arith.constant 3.125000e-02 : f32
    %3 = vector.broadcast %cst_1 : f32 to vector<16x1xf32>
    %4 = arith.mulf %2, %3 : vector<16x1xf32>
    %5 = vector.broadcast %4 : vector<16x1xf32> to vector<16x32xf32>
    %6 = arith.subf %0, %5 : vector<16x32xf32>
    %7 = arith.mulf %6, %6 : vector<16x32xf32>
    %cst_2 = arith.constant dense<0.000000e+00> : vector<16xf32>
    %8 = vector.multi_reduction <add>, %7, %cst_2 [1] : vector<16x32xf32> to vector<16xf32>
    %9 = vector.shape_cast %8 : vector<16xf32> to vector<16x1xf32>
    %cst_3 = arith.constant 0.0322580636 : f32
    %10 = vector.broadcast %cst_3 : f32 to vector<16x1xf32>
    %11 = arith.mulf %9, %10 : vector<16x1xf32>
    %12 = math.sqrt %11 : vector<16x1xf32>
    %cst_4 = arith.constant 9.99999997E-7 : f32
    %13 = vector.broadcast %cst_4 : f32 to vector<16x1xf32>
    %14 = arith.addf %12, %13 : vector<16x1xf32>
    %15 = tpu.reciprocal %14 : vector<16x1xf32> -> vector<16x1xf32>
    %c0_5 = arith.constant 0 : index
    %16 = memref.load %arg2[%c0_5] : memref<1xf32, #tpu.memory_space<smem>>
    %17 = vector.broadcast %16 : f32 to vector<16x1xf32>
    %18 = arith.mulf %17, %15 : vector<16x1xf32>
    %19 = vector.broadcast %18 : vector<16x1xf32> to vector<16x32xf32>
    %20 = arith.mulf %6, %19 : vector<16x32xf32>
    %c0_6 = arith.constant 0 : index
    %21 = memref.load %arg3[%c0_6] : memref<1xf32, #tpu.memory_space<smem>>
    %22 = vector.broadcast %21 : f32 to vector<16x32xf32>
    %23 = arith.addf %20, %22 : vector<16x32xf32>
    %c0_7 = arith.constant 0 : index
    %c0_8 = arith.constant 0 : index
    %24 = vector.load %arg4[%c0_7, %c0_8] : memref<16x32xf32, #tpu.memory_space<vmem>>, vector<16x32xf32>
    tpu.vector_store %arg4[%c0_7, %c0_8], %23 {strides = array<i32>} : memref<16x32xf32, #tpu.memory_space<vmem>>, vector<16x32xf32>,
    return
  }
  func.func @transform_0(%arg0: i32) -> (i32, i32) {
    %c0_i32 = arith.constant 0 : i32
    %c0_i32_0 = arith.constant 0 : i32
    return %arg0, %c0_i32 : i32, i32
  }
  func.func @transform_1(%arg0: i32) -> i32 {
    %c0_i32 = arith.constant 0 : i32
    %c0_i32_0 = arith.constant 0 : i32
    return %c0_i32 : i32
  }
  func.func @transform_2(%arg0: i32) -> i32 {
    %c0_i32 = arith.constant 0 : i32
    %c0_i32_0 = arith.constant 0 : i32
    return %c0_i32 : i32
  }
  func.func @transform_3(%arg0: i32) -> (i32, i32) {
    %c0_i32 = arith.constant 0 : i32
    %c0_i32_0 = arith.constant 0 : i32
    return %arg0, %c0_i32 : i32, i32
  }
}

</mosaic_0001>

<llo_original>
// kernel: tpu_custom_call.1
$region0: #{tpu_custom_call.1}
  #allocation0 [shape = 'u32[]', space=smem, size = 0x4, offset = 0x4, fixed_abs, tag = 'smem constant byte address 0x4 - core index']
  #allocation1 [shape = 'u32[144,128]{1,0:T(1,128)}', space=vmem, size = 0x12000, scoped, tag = 'internal scratch']
  #allocation2 [shape = 'f32[1]{0:T(128)S(6)}', space=smem, size = 0x200, scoped, tag = 'scoped memory for tpu_custom_call.1']
  #allocation3 [shape = 'f32[1]{0:T(128)S(6)}', space=smem, size = 0x200, scoped, tag = 'scoped memory for tpu_custom_call.1']
  %s0 = inlined_call_operand.hbm [shape: f32[16,32], index: 0, kind: input, shape index: {}]
  %s1 = inlined_call_operand.<no memory space> [shape: f32[1], index: 1, kind: input, shape index: {}]
  %s2 = inlined_call_operand.<no memory space> [shape: f32[1], index: 2, kind: input, shape index: {}]
  %s3 = inlined_call_operand.hbm [shape: f32[16,32], index: 3, kind: output, shape index: {}]
  %s4 = sld [smem:[#allocation0]]
  $region26: #{tpu_custom_call.1} parent=0
    _
  %s6 = ssub.s32 1, %s4
  %s7 = scalar_select 0, %s6, %s4
  %8 = sst [smem:[#allocation2]] %s1
  %9 = sst [smem:[#allocation3]] %s2
  $region1: #{tpu_custom_call.1} parent=0
    #allocation4 [shape = 'u8[8192]{0}', space=vmem, size = 0x2000, scoped, tag = 'input window, operand 0, single buffered']
    #allocation5 [shape = 's32[1]{0}', space=sflag, size = 0x4, scoped, tag = 'scoped memory for tpu_custom_call.1']
    #allocation6 [shape = 's32[1]{0}', space=sflag, size = 0x4, scoped, tag = 'scoped memory for tpu_custom_call.1']
    #allocation7 [shape = 'u8[8192]{0}', space=vmem, size = 0x2000, scoped, tag = 'output window, operand 0, single buffered']
    %10 = vsyncpa [#allocation5], 0
    %11 = vsyncpa [#allocation6], 0
    // Predicated region
    $region2: #{tpu_custom_call.1} parent=1 // pred_check
      _
    $region3: #{tpu_custom_call.1} parent=1 // pred_check_branch
      %13 = sbr.rel (0) target = $region5
    $region4: #{tpu_custom_call.1} parent=1 // pred_region
      %s15 = ssub.s32 256, 256
      %16 = vsyncadd [#allocation5], %s15
      %s17 = sshll.u32 [#allocation4], 4
      %s18 = int_to_ptr.vmem [resolvable:$true] %s17
      %23 = dma.hbm_to_vmem [thread:$0]  %s0, 256, %s18, [#allocation5], 128, 128, 8
    $region5: #{tpu_custom_call.1} parent=1 // pred_fallthru
      _
    // Predicated region
    $region6: #{tpu_custom_call.1} parent=1 // pred_check
      _
    $region7: #{tpu_custom_call.1} parent=1 // pred_check_branch
      %25 = sbr.rel (0) target = $region9
    $region8: #{tpu_custom_call.1} parent=1 // pred_region
      _
    $region9: #{tpu_custom_call.1} parent=1 // pred_fallthru
      _
    // Predicated region
    $region10: #{tpu_custom_call.1} parent=1 // pred_check
      _
    $region11: #{tpu_custom_call.1} parent=1 // pred_check_branch
      %27 = sbr.rel (0) target = $region13
    $region12: #{tpu_custom_call.1} parent=1 // pred_region
      _
    $region13: #{tpu_custom_call.1} parent=1 // pred_fallthru
      _
    // Predicated region
    $region14: #{tpu_custom_call.1} parent=1 // pred_check
      _
    $region15: #{tpu_custom_call.1} parent=1 // pred_check_branch
      %29 = sbr.rel (0) target = $region17
    $region16: #{tpu_custom_call.1} parent=1 // pred_region
      %30 = dma.done [#allocation5], 256
    $region17: #{tpu_custom_call.1} parent=1 // pred_fallthru
      _
    %v31 = vld [vmem:[#allocation4] sm:$0xff]
    %v32 = vld [vmem:[#allocation4 + $0x8] sm:$0xff]
    %vm33 = vcmask 261120
    %v34 = vsel %vm33, %v31, 0.0
    %35 = vadd.xlane.f32.xlu0 %v34
    %v36 = vpop.xlane.xlu0 %35
    %v37 = vsel %vm33, %v32, 0.0
    %38 = vadd.xlane.f32.xlu0 %v37
    %v39 = vpop.xlane.xlu0 %38
    %v40 = vmul.f32 %v36, 0.03125
    %v41 = vmul.f32 %v39, 0.03125
    %v42 = vsub.f32 %v31, %v40
    %v43 = vsub.f32 %v32, %v41
    %v44 = vmul.f32 %v42, %v42
    %v45 = vmul.f32 %v43, %v43
    %v46 = vsel %vm33, %v44, 0.0
    %47 = vadd.xlane.f32.xlu0 %v46
    %v48 = vpop.xlane.xlu0 %47
    %v49 = vsel %vm33, %v45, 0.0
    %50 = vadd.xlane.f32.xlu0 %v49
    %v51 = vpop.xlane.xlu0 %50
    %v52 = vmul.f32 %v48, 0.032258064
    %v53 = vmul.f32 %v51, 0.032258064
    %v54 = vrsqrt.pop %v52
    %v55 = vmul.f32 %v52, %v54
    %vm56 = vcmp.eq.f32.partialorder %v52, inf
    %v57 = vsel %vm56, %v52, %v55
    %vm58 = vcmp.eq.f32.partialorder %v52, 0.0
    %v59 = vand.u32 %v52, 2147483648
    %v60 = vsel %vm58, %v59, %v57
    %v61 = vrsqrt.pop %v53
    %v62 = vmul.f32 %v53, %v61
    %vm63 = vcmp.eq.f32.partialorder %v53, inf
    %v64 = vsel %vm63, %v53, %v62
    %vm65 = vcmp.eq.f32.partialorder %v53, 0.0
    %v66 = vand.u32 %v53, 2147483648
    %v67 = vsel %vm65, %v66, %v64
    %v68 = vadd.f32 %v60, 1e-06
    %v69 = vadd.f32 %v67, 1e-06
    %v70 = vrcp.pop %v68
    %v71 = vrcp.pop %v69
    %s72 = sld [smem:[#allocation2]]
    %v73 = vstv %s72
    %v74 = vmul.f32 %v73, %v70
    %v75 = vmul.f32 %v73, %v71
    %v76 = vmul.f32 %v42, %v74
    %v77 = vmul.f32 %v43, %v75
    %s78 = sld [smem:[#allocation3]]
    %v79 = vstv %s78
    %v80 = vadd.f32 %v76, %v79
    %v81 = vadd.f32 %v77, %v79
    %82 = vst.msk [vmem:[#allocation7] sm:$0xff] %vm33, %v80
    %83 = vst.msk [vmem:[#allocation7 + $0x8] sm:$0xff] %vm33, %v81
    // Predicated region
    $region18: #{tpu_custom_call.1} parent=1 // pred_check
      _
    $region19: #{tpu_custom_call.1} parent=1 // pred_check_branch
      %85 = sbr.rel (0) target = $region21
    $region20: #{tpu_custom_call.1} parent=1 // pred_region
      %s87 = ssub.s32 256, 256
      %88 = vsyncadd [#allocation6], %s87
      %s89 = sshll.u32 [#allocation7], 4
      %s90 = int_to_ptr.vmem [resolvable:$true] %s89
      %95 = dma.vmem_to_hbm [thread:$0]  %s90, 256, %s3, [#allocation6], 128, 128, 8
    $region21: #{tpu_custom_call.1} parent=1 // pred_fallthru
      _
    // Predicated region
    $region22: #{tpu_custom_call.1} parent=1 // pred_check
      _
    $region23: #{tpu_custom_call.1} parent=1 // pred_check_branch
      %97 = sbr.rel (0) target = $region25
    $region24: #{tpu_custom_call.1} parent=1 // pred_region
      %98 = dma.done [#allocation6], 256
    $region25: #{tpu_custom_call.1} parent=1 // pred_fallthru
      _
    %99 = vsyncpa [#allocation5], 1
    %100 = vsyncpa [#allocation6], 1

</llo_original>
